<compile_context>
chip_gen: v7x
topology: tpu7x:2x2x1
jax: 0.10.0
libtpu: 0.0.40
codegen_flags: <defaults>
</compile_context>

<pallas_src>
import jax
import jax.numpy as jnp
from jax.experimental import pallas as pl
from jax.experimental.pallas import tpu as pltpu


def _coma_mlp_kernel(x_ref, w1_ref, b1_ref, w2_ref, b2_ref, w3_ref, b3_ref,
                     o_ref):
    """Fused MLP tile: relu(relu(x@W1+b1)@W2+b2)@W3+b3 for one batch tile."""
    x = x_ref[...]  # (TILE_B, in_features); weights stay resident across tiles.

    h1 = jnp.dot(x, w1_ref[...], preferred_element_type=jnp.float32)
    h1 = jnp.maximum(h1 + b1_ref[...], 0.0)

    h2 = jnp.dot(h1, w2_ref[...], preferred_element_type=jnp.float32)
    h2 = jnp.maximum(h2 + b2_ref[...], 0.0)

    q = jnp.dot(h2, w3_ref[...], preferred_element_type=jnp.float32)
    q = q + b3_ref[...]

    o_ref[...] = q.astype(o_ref.dtype)


def _round_up(x, m):
    return (x + m - 1) // m * m


def coma_critic_forward(critic_state, params, *, tile_b=512):
    """Pallas-backed ComaCritic.forward.

    critic_state: (batch, input_shape) float32 (or bf16 if produced upstream)
    params: dict with w1 (in,H), b1 (1,H), w2 (H,H), b2 (1,H),
            w3 (H,actions), b3 (1,actions)
    returns: (batch, actions) float32 Q-values

    For COMA, reshape all (batch x timesteps x agents) critic states into a
    single (B_total, input_shape) array and make ONE call — the kernel is
    overhead-bound at tiny batches and roofline-bound at large ones.
    """
    w1, b1 = params["w1"], params["b1"]
    w2, b2 = params["w2"], params["b2"]
    w3, b3 = params["w3"], params["b3"]

    batch, in_f = critic_state.shape
    hidden = w1.shape[1]
    actions = w3.shape[1]

    # Batch tile: never bigger than the (sublane-padded) batch, cap at tile_b
    # (512 rows already reaches ~85% of HBM roofline; stays tiny in VMEM even
    # on v7x's 32 MiB scoped default, so no vmem_limit override needed).
    tb = min(tile_b, _round_up(max(batch, 1), 8))
    tb = _round_up(tb, 8)
    batch_pad = _round_up(batch, tb)

    x = critic_state
    if batch_pad != batch:
        x = jnp.pad(x, ((0, batch_pad - batch), (0, 0)))

    grid = (batch_pad // tb,)

    flops = 2 * batch_pad * (in_f * hidden + hidden * hidden + hidden * actions)
    weight_bytes = sum(
        int(a.size) * a.dtype.itemsize for a in (w1, b1, w2, b2, w3, b3))
    bytes_accessed = (
        batch_pad * in_f * x.dtype.itemsize
        + batch_pad * actions * 4
        + weight_bytes)

    out = pl.pallas_call(
        _coma_mlp_kernel,
        out_shape=jax.ShapeDtypeStruct((batch_pad, actions), jnp.float32),
        grid=grid,
        in_specs=[
            # Activations stream tile-by-tile over the batch axis.
            pl.BlockSpec((tb, in_f), lambda i: (i, 0)),
            # Weights/biases pinned: same block every step -> VMEM-resident.
            pl.BlockSpec((in_f, hidden), lambda i: (0, 0)),
            pl.BlockSpec((1, hidden), lambda i: (0, 0)),
            pl.BlockSpec((hidden, hidden), lambda i: (0, 0)),
            pl.BlockSpec((1, hidden), lambda i: (0, 0)),
            pl.BlockSpec((hidden, actions), lambda i: (0, 0)),
            pl.BlockSpec((1, actions), lambda i: (0, 0)),
        ],
        out_specs=pl.BlockSpec((tb, actions), lambda i: (i, 0)),
        compiler_params=pltpu.CompilerParams(
            dimension_semantics=("parallel",)),
        cost_estimate=pl.CostEstimate(
            flops=flops, transcendentals=0, bytes_accessed=bytes_accessed),
    )(x, w1, b1, w2, b2, w3, b3)

    return out[:batch]


def init_params(key, input_shape, hidden, actions):
    """Deterministic init mimicking PyTorch Linear default U(-1/sqrt(fan_in), +)."""
    ks = jax.random.split(key, 6)

    def lin(kw, kb, fan_in, fan_out):
        bound = 1.0 / jnp.sqrt(jnp.asarray(fan_in, jnp.float32))
        w = jax.random.uniform(kw, (fan_in, fan_out), jnp.float32, -bound, bound)
        b = jax.random.uniform(kb, (1, fan_out), jnp.float32, -bound, bound)
        return w, b

    w1, b1 = lin(ks[0], ks[1], input_shape, hidden)
    w2, b2 = lin(ks[2], ks[3], hidden, hidden)
    w3, b3 = lin(ks[4], ks[5], hidden, actions)
    return dict(w1=w1, b1=b1, w2=w2, b2=b2, w3=w3, b3=b3)


def reference_forward(critic_state, p):
    h1 = jnp.maximum(critic_state @ p["w1"] + p["b1"], 0.0)
    h2 = jnp.maximum(h1 @ p["w2"] + p["b2"], 0.0)
    return h2 @ p["w3"] + p["b3"]


if __name__ == "__main__":
    # Synthetic ComaCritic config:
    #   obs_dim = 8, n_agents = 3  ->  input_shape = 1 + 8*3 + 3 = 28
    #   critic_hidden = 32, n_actions = 5
    obs_dim, n_agents = 8, 3
    input_shape = 1 + obs_dim * n_agents + n_agents  # 28
    hidden = 32
    actions = 5

    key = jax.random.PRNGKey(0)
    k_params, k_small, k_big = jax.random.split(key, 3)
    params = init_params(k_params, input_shape, hidden, actions)

    # 1) Small per-step batch (matches the module's typical call shape).
    batch_small = 8
    x_small = jax.random.normal(k_small, (batch_small, input_shape), jnp.float32)
    q_small = jax.block_until_ready(coma_critic_forward(x_small, params))
    assert q_small.shape == (batch_small, actions), q_small.shape
    assert jnp.allclose(q_small, reference_forward(x_small, params),
                        atol=1e-5, rtol=1e-5), "small-batch mismatch"

    # 2) Batched COMA evaluation (batch x timesteps x agents flattened into one
    #    call) — exercises the batch grid, resident weights, and tail padding.
    batch_big = 600  # not a multiple of 512 -> exercises padded final tile
    x_big = jax.random.normal(k_big, (batch_big, input_shape), jnp.float32)
    q_big = jax.block_until_ready(coma_critic_forward(x_big, params))
    assert q_big.shape == (batch_big, actions), q_big.shape
    assert jnp.allclose(q_big, reference_forward(x_big, params),
                        atol=1e-4, rtol=1e-4), "large-batch mismatch"

    print("KERNEL_OK")
</pallas_src>

<mosaic_0001>
module attributes {stable_mosaic.version = 11 : i64} {
  func.func @_coma_mlp_kernel(%arg0: i32, %arg1: memref<8x28xf32, #tpu.memory_space<vmem>>, %arg2: memref<28x32xf32, #tpu.memory_space<vmem>>, %arg3: memref<1x32xf32, #tpu.memory_space<vmem>>, %arg4: memref<32x32xf32, #tpu.memory_space<vmem>>, %arg5: memref<1x32xf32, #tpu.memory_space<vmem>>, %arg6: memref<32x5xf32, #tpu.memory_space<vmem>>, %arg7: memref<1x5xf32, #tpu.memory_space<vmem>>, %arg8: memref<8x5xf32, #tpu.memory_space<vmem>>) attributes {dimension_semantics = [#tpu.dimension_semantics<parallel>], iteration_bounds = array<i64: 1>, scalar_prefetch = 0 : i64, scratch_operands = 0 : i64, tpu.core_type = #tpu.core_type<tc>, window_params = [{transform_indices = @transform_0, window_bounds = array<i64: 8, 28>}, {pipeline_mode = #tpu.pipeline_mode<synchronous>, transform_indices = @transform_1, window_bounds = array<i64: 28, 32>}, {pipeline_mode = #tpu.pipeline_mode<synchronous>, transform_indices = @transform_2, window_bounds = array<i64: 1, 32>}, {pipeline_mode = #tpu.pipeline_mode<synchronous>, transform_indices = @transform_3, window_bounds = array<i64: 32, 32>}, {pipeline_mode = #tpu.pipeline_mode<synchronous>, transform_indices = @transform_4, window_bounds = array<i64: 1, 32>}, {pipeline_mode = #tpu.pipeline_mode<synchronous>, transform_indices = @transform_5, window_bounds = array<i64: 32, 5>}, {pipeline_mode = #tpu.pipeline_mode<synchronous>, transform_indices = @transform_6, window_bounds = array<i64: 1, 5>}, {transform_indices = @transform_7, window_bounds = array<i64: 8, 5>}]} {
    %c0 = arith.constant 0 : index
    %c0_0 = arith.constant 0 : index
    %0 = vector.load %arg1[%c0, %c0_0] : memref<8x28xf32, #tpu.memory_space<vmem>>, vector<8x28xf32>
    %c0_1 = arith.constant 0 : index
    %c0_2 = arith.constant 0 : index
    %1 = vector.load %arg2[%c0_1, %c0_2] : memref<28x32xf32, #tpu.memory_space<vmem>>, vector<28x32xf32>
    %cst = arith.constant dense<0.000000e+00> : vector<8x32xf32>
    %2 = tpu.matmul %0, %1, %cst {dimension_numbers = #tpu.dot_dimension_numbers<[1], [0], [0], [1], [0, 0, 1, 1], [], []>} : vector<8x28xf32>, vector<28x32xf32>, vector<8x32xf32> -> vector<8x32xf32>
    %c0_3 = arith.constant 0 : index
    %c0_4 = arith.constant 0 : index
    %3 = vector.load %arg3[%c0_3, %c0_4] : memref<1x32xf32, #tpu.memory_space<vmem>>, vector<1x32xf32>
    %4 = vector.broadcast %3 : vector<1x32xf32> to vector<8x32xf32>
    %5 = arith.addf %2, %4 : vector<8x32xf32>
    %cst_5 = arith.constant 0.000000e+00 : f32
    %6 = vector.broadcast %cst_5 : f32 to vector<8x32xf32>
    %7 = arith.maximumf %5, %6 : vector<8x32xf32>
    %c0_6 = arith.constant 0 : index
    %c0_7 = arith.constant 0 : index
    %8 = vector.load %arg4[%c0_6, %c0_7] : memref<32x32xf32, #tpu.memory_space<vmem>>, vector<32x32xf32>
    %cst_8 = arith.constant dense<0.000000e+00> : vector<8x32xf32>
    %9 = tpu.matmul %7, %8, %cst_8 {dimension_numbers = #tpu.dot_dimension_numbers<[1], [0], [0], [1], [0, 0, 1, 1], [], []>} : vector<8x32xf32>, vector<32x32xf32>, vector<8x32xf32> -> vector<8x32xf32>
    %c0_9 = arith.constant 0 : index
    %c0_10 = arith.constant 0 : index
    %10 = vector.load %arg5[%c0_9, %c0_10] : memref<1x32xf32, #tpu.memory_space<vmem>>, vector<1x32xf32>
    %11 = vector.broadcast %10 : vector<1x32xf32> to vector<8x32xf32>
    %12 = arith.addf %9, %11 : vector<8x32xf32>
    %cst_11 = arith.constant 0.000000e+00 : f32
    %13 = vector.broadcast %cst_11 : f32 to vector<8x32xf32>
    %14 = arith.maximumf %12, %13 : vector<8x32xf32>
    %c0_12 = arith.constant 0 : index
    %c0_13 = arith.constant 0 : index
    %15 = vector.load %arg6[%c0_12, %c0_13] : memref<32x5xf32, #tpu.memory_space<vmem>>, vector<32x5xf32>
    %cst_14 = arith.constant dense<0.000000e+00> : vector<8x5xf32>
    %16 = tpu.matmul %14, %15, %cst_14 {dimension_numbers = #tpu.dot_dimension_numbers<[1], [0], [0], [1], [0, 0, 1, 1], [], []>} : vector<8x32xf32>, vector<32x5xf32>, vector<8x5xf32> -> vector<8x5xf32>
    %c0_15 = arith.constant 0 : index
    %c0_16 = arith.constant 0 : index
    %17 = vector.load %arg7[%c0_15, %c0_16] : memref<1x5xf32, #tpu.memory_space<vmem>>, vector<1x5xf32>
    %18 = vector.broadcast %17 : vector<1x5xf32> to vector<8x5xf32>
    %19 = arith.addf %16, %18 : vector<8x5xf32>
    %c0_17 = arith.constant 0 : index
    %c0_18 = arith.constant 0 : index
    %20 = vector.load %arg8[%c0_17, %c0_18] : memref<8x5xf32, #tpu.memory_space<vmem>>, vector<8x5xf32>
    tpu.vector_store %arg8[%c0_17, %c0_18], %19 {strides = array<i32>} : memref<8x5xf32, #tpu.memory_space<vmem>>, vector<8x5xf32>,
    return
  }
  func.func @transform_0(%arg0: i32) -> (i32, i32) {
    %c0_i32 = arith.constant 0 : i32
    %c0_i32_0 = arith.constant 0 : i32
    return %arg0, %c0_i32 : i32, i32
  }
  func.func @transform_1(%arg0: i32) -> (i32, i32) {
    %c0_i32 = arith.constant 0 : i32
    %c0_i32_0 = arith.constant 0 : i32
    %c0_i32_1 = arith.constant 0 : i32
    return %c0_i32, %c0_i32_0 : i32, i32
  }
  func.func @transform_2(%arg0: i32) -> (i32, i32) {
    %c0_i32 = arith.constant 0 : i32
    %c0_i32_0 = arith.constant 0 : i32
    %c0_i32_1 = arith.constant 0 : i32
    return %c0_i32, %c0_i32_0 : i32, i32
  }
  func.func @transform_3(%arg0: i32) -> (i32, i32) {
    %c0_i32 = arith.constant 0 : i32
    %c0_i32_0 = arith.constant 0 : i32
    %c0_i32_1 = arith.constant 0 : i32
    return %c0_i32, %c0_i32_0 : i32, i32
  }
  func.func @transform_4(%arg0: i32) -> (i32, i32) {
    %c0_i32 = arith.constant 0 : i32
    %c0_i32_0 = arith.constant 0 : i32
    %c0_i32_1 = arith.constant 0 : i32
    return %c0_i32, %c0_i32_0 : i32, i32
  }
  func.func @transform_5(%arg0: i32) -> (i32, i32) {
    %c0_i32 = arith.constant 0 : i32
    %c0_i32_0 = arith.constant 0 : i32
    %c0_i32_1 = arith.constant 0 : i32
    return %c0_i32, %c0_i32_0 : i32, i32
  }
  func.func @transform_6(%arg0: i32) -> (i32, i32) {
    %c0_i32 = arith.constant 0 : i32
    %c0_i32_0 = arith.constant 0 : i32
    %c0_i32_1 = arith.constant 0 : i32
    return %c0_i32, %c0_i32_0 : i32, i32
  }
  func.func @transform_7(%arg0: i32) -> (i32, i32) {
    %c0_i32 = arith.constant 0 : i32
    %c0_i32_0 = arith.constant 0 : i32
    return %arg0, %c0_i32 : i32, i32
  }
}

</mosaic_0001>

<llo_original>
// kernel: tpu_custom_call.1
$region0: #{tpu_custom_call.1}
  #allocation0 [shape = 'u32[]', space=smem, size = 0x4, offset = 0x4, fixed_abs, tag = 'smem constant byte address 0x4 - core index']
  #allocation1 [shape = 'u32[144,128]{1,0:T(1,128)}', space=vmem, size = 0x12000, scoped, tag = 'internal scratch']
  %s0 = inlined_call_operand.vmem [shape: f32[8,28], index: 0, kind: input, shape index: {}]
  %s1 = inlined_call_operand.vmem [shape: f32[28,32], index: 1, kind: input, shape index: {}]
  %s2 = inlined_call_operand.vmem [shape: f32[1,32], index: 2, kind: input, shape index: {}]
  %s3 = inlined_call_operand.hbm [shape: f32[32,32], index: 3, kind: input, shape index: {}]
  %s4 = inlined_call_operand.vmem [shape: f32[1,32], index: 4, kind: input, shape index: {}]
  %s5 = inlined_call_operand.vmem [shape: f32[32,5], index: 5, kind: input, shape index: {}]
  %s6 = inlined_call_operand.vmem [shape: f32[1,5], index: 6, kind: input, shape index: {}]
  %s7 = inlined_call_operand.hbm [shape: f32[8,5], index: 7, kind: output, shape index: {}]
  %s8 = sld [smem:[#allocation0]]
  $region42: #{tpu_custom_call.1} parent=0
    _
  %s10 = ssub.s32 1, %s8
  %s11 = scalar_select 0, %s10, %s8
  $region1: #{tpu_custom_call.1} parent=0
    #allocation2 [shape = 'u8[16384]{0}', space=vmem, size = 0x4000, scoped, tag = 'input window, operand 3, single buffered']
    #allocation3 [shape = 's32[1]{0}', space=sflag, size = 0x4, scoped, tag = 'scoped memory for tpu_custom_call.1']
    #allocation4 [shape = 's32[1]{0}', space=sflag, size = 0x4, scoped, tag = 'scoped memory for tpu_custom_call.1']
    #allocation5 [shape = 'u8[4096]{0}', space=vmem, size = 0x1000, scoped, tag = 'output window, operand 0, single buffered']
    %12 = vsyncpa [#allocation3], 0
    %13 = vsyncpa [#allocation4], 0
    // Predicated region
    $region2: #{tpu_custom_call.1} parent=1 // pred_check
      _
    $region3: #{tpu_custom_call.1} parent=1 // pred_check_branch
      %15 = sbr.rel (0) target = $region5
    $region4: #{tpu_custom_call.1} parent=1 // pred_region
      _
    $region5: #{tpu_custom_call.1} parent=1 // pred_fallthru
      _
    // Predicated region
    $region6: #{tpu_custom_call.1} parent=1 // pred_check
      _
    $region7: #{tpu_custom_call.1} parent=1 // pred_check_branch
      %17 = sbr.rel (0) target = $region9
    $region8: #{tpu_custom_call.1} parent=1 // pred_region
      _
    $region9: #{tpu_custom_call.1} parent=1 // pred_fallthru
      _
    // Predicated region
    $region10: #{tpu_custom_call.1} parent=1 // pred_check
      _
    $region11: #{tpu_custom_call.1} parent=1 // pred_check_branch
      %19 = sbr.rel (0) target = $region13
    $region12: #{tpu_custom_call.1} parent=1 // pred_region
      _
    $region13: #{tpu_custom_call.1} parent=1 // pred_fallthru
      _
    // Predicated region
    $region14: #{tpu_custom_call.1} parent=1 // pred_check
      _
    $region15: #{tpu_custom_call.1} parent=1 // pred_check_branch
      %21 = sbr.rel (0) target = $region17
    $region16: #{tpu_custom_call.1} parent=1 // pred_region
      %s23 = ssub.s32 512, 512
      %24 = vsyncadd [#allocation3], %s23
      %s25 = sshll.u32 [#allocation2], 4
      %s26 = int_to_ptr.vmem [resolvable:$true] %s25
      %31 = dma.hbm_to_vmem [thread:$0]  %s3, 512, %s26, [#allocation3], 128, 128, 8
    $region17: #{tpu_custom_call.1} parent=1 // pred_fallthru
      _
    // Predicated region
    $region18: #{tpu_custom_call.1} parent=1 // pred_check
      _
    $region19: #{tpu_custom_call.1} parent=1 // pred_check_branch
      %33 = sbr.rel (0) target = $region21
    $region20: #{tpu_custom_call.1} parent=1 // pred_region
      _
    $region21: #{tpu_custom_call.1} parent=1 // pred_fallthru
      _
    // Predicated region
    $region22: #{tpu_custom_call.1} parent=1 // pred_check
      _
    $region23: #{tpu_custom_call.1} parent=1 // pred_check_branch
      %35 = sbr.rel (0) target = $region25
    $region24: #{tpu_custom_call.1} parent=1 // pred_region
      _
    $region25: #{tpu_custom_call.1} parent=1 // pred_fallthru
      _
    // Predicated region
    $region26: #{tpu_custom_call.1} parent=1 // pred_check
      _
    $region27: #{tpu_custom_call.1} parent=1 // pred_check_branch
      %37 = sbr.rel (0) target = $region29
    $region28: #{tpu_custom_call.1} parent=1 // pred_region
      _
    $region29: #{tpu_custom_call.1} parent=1 // pred_fallthru
      _
    // Predicated region
    $region30: #{tpu_custom_call.1} parent=1 // pred_check
      _
    $region31: #{tpu_custom_call.1} parent=1 // pred_check_branch
      %39 = sbr.rel (0) target = $region33
    $region32: #{tpu_custom_call.1} parent=1 // pred_region
      %40 = dma.done [#allocation3], 512
    $region33: #{tpu_custom_call.1} parent=1 // pred_fallthru
      _
    %v41 = vld [vmem:[%s0] sm:$0xff]
    %v42 = vld [vmem:[%s1] sm:$0xff]
    %v43 = vld [vmem:[%s1 + $0x8] sm:$0xff]
    %v44 = vld [vmem:[%s1 + $0x10] sm:$0xff]
    %v45 = vld [vmem:[%s1 + $0x18] sm:$0xf]
    %v46 = vld [vmem:[%s2] sm:$0x1]
    %v48 = vlaneseq
    %v49 = vshrl.u32 %v48, 7
    %v50 = vsub.s32 0, %v49
    %v51 = vrot.slane %v46, %v50
    %vm53 = vcmask 228352
    %v55 = vsel %vm53, %v41, 0
    %vm57 = vcmask 1043456
    %v59 = vsel %vm57, %v45, 0
    %61 = vmatprep.subr.mxu0 0.0
    %62 = vmatpush1.msra.mxu0 %v42
    %63 = vmatprep.subr.mxu0 0.0
    %64 = vmatpush1.msra.mxu0 %v43
    %65 = vmatprep.subr.mxu0 0.0
    %66 = vmatpush1.msra.mxu0 %v44
    %67 = vmatprep.subr.mxu0 0.0
    %68 = vmatpush1.msra.mxu0 %v59
    %69 = vmatprep.subr.mxu0 0.0
    %70 = vmatpush1.msra.mxu0 0.0
    %71 = vmatprep.subr.mxu0 0.0
    %72 = vmatpush1.msra.mxu0 0.0
    %73 = vmatprep.subr.mxu0 0.0
    %74 = vmatpush1.msra.mxu0 0.0
    %75 = vmatprep.subr.mxu0 0.0
    %76 = vmatpush1.msra.mxu0 0.0
    %77 = vmatprep.subr.mxu0 0.0
    %78 = vmatpush1.msra.mxu0 0.0
    %79 = vmatprep.subr.mxu0 0.0
    %80 = vmatpush1.msra.mxu0 0.0
    %81 = vmatprep.subr.mxu0 0.0
    %82 = vmatpush1.msra.mxu0 0.0
    %83 = vmatprep.subr.mxu0 0.0
    %84 = vmatpush1.msra.mxu0 0.0
    %85 = vmatprep.subr.mxu0 0.0
    %86 = vmatpush1.msra.mxu0 0.0
    %87 = vmatprep.subr.mxu0 0.0
    %88 = vmatpush1.msra.mxu0 0.0
    %89 = vmatprep.subr.mxu0 0.0
    %90 = vmatpush1.msra.mxu0 0.0
    %91 = vmatprep.subr.mxu0 0.0
    %92 = vmatpush1.msra.mxu0 0.0
    %93 = vmatprep.subr.mxu0 0.0
    %94 = vmatpush1.msra.mxu0 0.0
    %95 = vmatprep.subr.mxu0 0.0
    %96 = vmatpush1.msra.mxu0 0.0
    %97 = vmatprep.subr.mxu0 0.0
    %98 = vmatpush1.msra.mxu0 0.0
    %99 = vmatprep.subr.mxu0 0.0
    %100 = vmatpush1.msra.mxu0 0.0
    %101 = vmatprep.subr.mxu0 0.0
    %102 = vmatpush1.msra.mxu0 0.0
    %103 = vmatprep.subr.mxu0 0.0
    %104 = vmatpush1.msra.mxu0 0.0
    %105 = vmatprep.subr.mxu0 0.0
    %106 = vmatpush1.msra.mxu0 0.0
    %107 = vmatprep.subr.mxu0 0.0
    %108 = vmatpush1.msra.mxu0 0.0
    %109 = vmatprep.subr.mxu0 0.0
    %110 = vmatpush1.msra.mxu0 0.0
    %111 = vmatprep.subr.mxu0 0.0
    %112 = vmatpush1.msra.mxu0 0.0
    %113 = vmatprep.subr.mxu0 0.0
    %114 = vmatpush1.msra.mxu0 0.0
    %115 = vmatprep.subr.mxu0 0.0
    %116 = vmatpush1.msra.mxu0 0.0
    %117 = vmatprep.subr.mxu0 0.0
    %118 = vmatpush1.msra.mxu0 0.0
    %119 = vmatprep.subr.mxu0 0.0
    %120 = vmatpush1.msra.mxu0 0.0
    %121 = vmatprep.subr.mxu0 0.0
    %122 = vmatpush1.msra.mxu0 0.0
    %123 = vmatprep.subr.mxu0 0.0
    %124 = vmatpush1.msra.mxu0 0.0
    %125 = vmatprep.mubr.f32.mxu0 0.0
    %126 = vmatmul.mubr.f32.gmra.mrb[0].mxu0 %v55
    %v127 = vpop.f32.mrb[0].mxu0
    %v128 = vadd.f32 %v51, %v127
    %v129 = vpop.f32.mrb[0].mxu0
    %130 = vdwg.mxu0
    %v131 = vmax.f32 %v128, 0.0
    %v132 = vld [vmem:[#allocation2] sm:$0xff]
    %v133 = vld [vmem:[#allocation2 + $0x8] sm:$0xff]
    %v134 = vld [vmem:[#allocation2 + $0x10] sm:$0xff]
    %v135 = vld [vmem:[#allocation2 + $0x18] sm:$0xff]
    %v136 = vld [vmem:[%s4] sm:$0x1]
    %v138 = vlaneseq
    %v139 = vshrl.u32 %v138, 7
    %v140 = vsub.s32 0, %v139
    %v141 = vrot.slane %v136, %v140
    %vm143 = vcmask 261120
    %v145 = vsel %vm143, %v131, 0
    %147 = vmatprep.subr.mxu0 0.0
    %148 = vmatpush1.msra.mxu0 %v132
    %149 = vmatprep.subr.mxu0 0.0
    %150 = vmatpush1.msra.mxu0 %v133
    %151 = vmatprep.subr.mxu0 0.0
    %152 = vmatpush1.msra.mxu0 %v134
    %153 = vmatprep.subr.mxu0 0.0
    %154 = vmatpush1.msra.mxu0 %v135
    %155 = vmatprep.subr.mxu0 0.0
    %156 = vmatpush1.msra.mxu0 0.0
    %157 = vmatprep.subr.mxu0 0.0
    %158 = vmatpush1.msra.mxu0 0.0
    %159 = vmatprep.subr.mxu0 0.0
    %160 = vmatpush1.msra.mxu0 0.0
    %161 = vmatprep.subr.mxu0 0.0
    %162 = vmatpush1.msra.mxu0 0.0
    %163 = vmatprep.subr.mxu0 0.0
    %164 = vmatpush1.msra.mxu0 0.0
    %165 = vmatprep.subr.mxu0 0.0
    %166 = vmatpush1.msra.mxu0 0.0
    %167 = vmatprep.subr.mxu0 0.0
    %168 = vmatpush1.msra.mxu0 0.0
    %169 = vmatprep.subr.mxu0 0.0
    %170 = vmatpush1.msra.mxu0 0.0
    %171 = vmatprep.subr.mxu0 0.0
    %172 = vmatpush1.msra.mxu0 0.0
    %173 = vmatprep.subr.mxu0 0.0
    %174 = vmatpush1.msra.mxu0 0.0
    %175 = vmatprep.subr.mxu0 0.0
    %176 = vmatpush1.msra.mxu0 0.0
    %177 = vmatprep.subr.mxu0 0.0
    %178 = vmatpush1.msra.mxu0 0.0
    %179 = vmatprep.subr.mxu0 0.0
    %180 = vmatpush1.msra.mxu0 0.0
    %181 = vmatprep.subr.mxu0 0.0
    %182 = vmatpush1.msra.mxu0 0.0
    %183 = vmatprep.subr.mxu0 0.0
    %184 = vmatpush1.msra.mxu0 0.0
    %185 = vmatprep.subr.mxu0 0.0
    %186 = vmatpush1.msra.mxu0 0.0
    %187 = vmatprep.subr.mxu0 0.0
    %188 = vmatpush1.msra.mxu0 0.0
    %189 = vmatprep.subr.mxu0 0.0
    %190 = vmatpush1.msra.mxu0 0.0
    %191 = vmatprep.subr.mxu0 0.0
    %192 = vmatpush1.msra.mxu0 0.0
    %193 = vmatprep.subr.mxu0 0.0
    %194 = vmatpush1.msra.mxu0 0.0
    %195 = vmatprep.subr.mxu0 0.0
    %196 = vmatpush1.msra.mxu0 0.0
    %197 = vmatprep.subr.mxu0 0.0
    %198 = vmatpush1.msra.mxu0 0.0
    %199 = vmatprep.subr.mxu0 0.0
    %200 = vmatpush1.msra.mxu0 0.0
    %201 = vmatprep.subr.mxu0 0.0
    %202 = vmatpush1.msra.mxu0 0.0
    %203 = vmatprep.subr.mxu0 0.0
    %204 = vmatpush1.msra.mxu0 0.0
    %205 = vmatprep.subr.mxu0 0.0
    %206 = vmatpush1.msra.mxu0 0.0
    %207 = vmatprep.subr.mxu0 0.0
    %208 = vmatpush1.msra.mxu0 0.0
    %209 = vmatprep.subr.mxu0 0.0
    %210 = vmatpush1.msra.mxu0 0.0
    %211 = vmatprep.mubr.f32.mxu0 0.0
    %212 = vmatmul.mubr.f32.gmra.mrb[0].mxu0 %v145
    %v213 = vpop.f32.mrb[0].mxu0
    %v214 = vadd.f32 %v141, %v213
    %v215 = vpop.f32.mrb[0].mxu0
    %216 = vdwg.mxu0
    %v217 = vmax.f32 %v214, 0.0
    %v218 = vld [vmem:[%s5] sm:$0xff]
    %v219 = vld [vmem:[%s5 + $0x8] sm:$0xff]
    %v220 = vld [vmem:[%s5 + $0x10] sm:$0xff]
    %v221 = vld [vmem:[%s5 + $0x18] sm:$0xff]
    %v222 = vld [vmem:[%s6] sm:$0x1]
    %v224 = vlaneseq
    %v225 = vshrl.u32 %v224, 7
    %v226 = vsub.s32 0, %v225
    %v227 = vrot.slane %v222, %v226
    %v230 = vsel %vm143, %v217, 0
    %232 = vmatprep.subr.mxu0 0.0
    %233 = vmatpush1.msra.mxu0 %v218
    %234 = vmatprep.subr.mxu0 0.0
    %235 = vmatpush1.msra.mxu0 %v219
    %236 = vmatprep.subr.mxu0 0.0
    %237 = vmatpush1.msra.mxu0 %v220
    %238 = vmatprep.subr.mxu0 0.0
    %239 = vmatpush1.msra.mxu0 %v221
    %240 = vmatprep.subr.mxu0 0.0
    %241 = vmatpush1.msra.mxu0 0.0
    %242 = vmatprep.subr.mxu0 0.0
    %243 = vmatpush1.msra.mxu0 0.0
    %244 = vmatprep.subr.mxu0 0.0
    %245 = vmatpush1.msra.mxu0 0.0
    %246 = vmatprep.subr.mxu0 0.0
    %247 = vmatpush1.msra.mxu0 0.0
    %248 = vmatprep.subr.mxu0 0.0
    %249 = vmatpush1.msra.mxu0 0.0
    %250 = vmatprep.subr.mxu0 0.0
    %251 = vmatpush1.msra.mxu0 0.0
    %252 = vmatprep.subr.mxu0 0.0
    %253 = vmatpush1.msra.mxu0 0.0
    %254 = vmatprep.subr.mxu0 0.0
    %255 = vmatpush1.msra.mxu0 0.0
    %256 = vmatprep.subr.mxu0 0.0
    %257 = vmatpush1.msra.mxu0 0.0
    %258 = vmatprep.subr.mxu0 0.0
    %259 = vmatpush1.msra.mxu0 0.0
    %260 = vmatprep.subr.mxu0 0.0
    %261 = vmatpush1.msra.mxu0 0.0
    %262 = vmatprep.subr.mxu0 0.0
    %263 = vmatpush1.msra.mxu0 0.0
    %264 = vmatprep.subr.mxu0 0.0
    %265 = vmatpush1.msra.mxu0 0.0
    %266 = vmatprep.subr.mxu0 0.0
    %267 = vmatpush1.msra.mxu0 0.0
    %268 = vmatprep.subr.mxu0 0.0
    %269 = vmatpush1.msra.mxu0 0.0
    %270 = vmatprep.subr.mxu0 0.0
    %271 = vmatpush1.msra.mxu0 0.0
    %272 = vmatprep.subr.mxu0 0.0
    %273 = vmatpush1.msra.mxu0 0.0
    %274 = vmatprep.subr.mxu0 0.0
    %275 = vmatpush1.msra.mxu0 0.0
    %276 = vmatprep.subr.mxu0 0.0
    %277 = vmatpush1.msra.mxu0 0.0
    %278 = vmatprep.subr.mxu0 0.0
    %279 = vmatpush1.msra.mxu0 0.0
    %280 = vmatprep.subr.mxu0 0.0
    %281 = vmatpush1.msra.mxu0 0.0
    %282 = vmatprep.subr.mxu0 0.0
    %283 = vmatpush1.msra.mxu0 0.0
    %284 = vmatprep.subr.mxu0 0.0
    %285 = vmatpush1.msra.mxu0 0.0
    %286 = vmatprep.subr.mxu0 0.0
    %287 = vmatpush1.msra.mxu0 0.0
    %288 = vmatprep.subr.mxu0 0.0
    %289 = vmatpush1.msra.mxu0 0.0
    %290 = vmatprep.subr.mxu0 0.0
    %291 = vmatpush1.msra.mxu0 0.0
    %292 = vmatprep.subr.mxu0 0.0
    %293 = vmatpush1.msra.mxu0 0.0
    %294 = vmatprep.subr.mxu0 0.0
    %295 = vmatpush1.msra.mxu0 0.0
    %296 = vmatprep.mubr.f32.mxu0 0.0
    %297 = vmatmul.mubr.f32.gmra.mrb[0].mxu0 %v230
    %v298 = vpop.f32.mrb[0].mxu0
    %v299 = vadd.f32 %v227, %v298
    %v300 = vpop.f32.mrb[0].mxu0
    %301 = vdwg.mxu0
    %vm302 = vcmask 39936
    %303 = vst.msk [vmem:[#allocation5] sm:$0xff] %vm302, %v299
    // Predicated region
    $region34: #{tpu_custom_call.1} parent=1 // pred_check
      _
    $region35: #{tpu_custom_call.1} parent=1 // pred_check_branch
      %305 = sbr.rel (0) target = $region37
    $region36: #{tpu_custom_call.1} parent=1 // pred_region
      %s307 = ssub.s32 128, 128
      %308 = vsyncadd [#allocation4], %s307
      %s310 = sshll.u32 [#allocation5], 4
      %s311 = int_to_ptr.vmem [resolvable:$true] %s310
      %313 = dma.vmem_to_hbm [thread:$0]  %s311, 128, %s7, [#allocation4]
    $region37: #{tpu_custom_call.1} parent=1 // pred_fallthru
      _
    // Predicated region
    $region38: #{tpu_custom_call.1} parent=1 // pred_check
      _
    $region39: #{tpu_custom_call.1} parent=1 // pred_check_branch
      %315 = sbr.rel (0) target = $region41
    $region40: #{tpu_custom_call.1} parent=1 // pred_region
      %316 = dma.done [#allocation4], 128
    $region41: #{tpu_custom_call.1} parent=1 // pred_fallthru
      _
    %317 = vsyncpa [#allocation3], 1
    %318 = vsyncpa [#allocation4], 1

</llo_original>
